<compile_context>
chip_gen: v7x
topology: tpu7x:2x2x1
jax: 0.10.0
libtpu: 0.0.40
codegen_flags: <defaults>
</compile_context>

<pallas_src>
import jax
import jax.numpy as jnp
from jax.experimental import pallas as pl
from jax.experimental.pallas import tpu as pltpu


def _round_up(x: int, m: int) -> int:
    return (x + m - 1) // m * m


def base_head_kernel(x0_ref, x1_ref, w1a_ref, w1b_ref, w2_ref, b2_ref,
                     w3_ref, b3_ref, o_ref):
    """Fused head: (concat+linear)+SiLU, (linear+bias)+SiLU, final reduce."""
    # Layer 1: Linear(in_feat -> fc1, bias=False) with the concat fused into
    # two matmuls:  [x0 | x1] @ [w1a ; w1b]  ==  x0 @ w1a + x1 @ w1b
    h = jnp.dot(x0_ref[...], w1a_ref[...], preferred_element_type=jnp.float32)
    h = h + jnp.dot(x1_ref[...], w1b_ref[...],
                    preferred_element_type=jnp.float32)          # (TB, fc1)
    h = h * jax.nn.sigmoid(h)                                    # SiLU

    # Layer 2: Linear(fc1 -> fc2) with BN1 folded in (w2' = s1*w2, b2' = t1@w2)
    g = jnp.dot(h, w2_ref[...],
                preferred_element_type=jnp.float32) + b2_ref[...]  # (TB, fc2)
    g = g * jax.nn.sigmoid(g)                                      # SiLU

    # Layer 3: Linear(fc2 -> 1, bias) with BN2 folded in, as a per-row lane
    # reduce; write the result as a lane-dense (1, TILE_B) slab.
    o = jnp.sum(g * w3_ref[...], axis=-1)                        # (TB,)
    o_ref[...] = o.reshape(1, -1) + b3_ref[...]                  # (1, TB)


def base_head_forward(x0, x1, params, *, tile_b=2048):
    """x0: (B, backbone_feat), x1: (B, n_orders) one-hot. Returns (B, 1) f32."""
    B, backbone_feat = x0.shape
    n_orders = x1.shape[1]
    fc1 = params["w1a"].shape[1]
    fc2 = params["w2"].shape[1]

    # Fold the eval-mode BatchNorms into the following Linear layers (tiny,
    # weight-only ops done once per call; mathematically identical in eval).
    w2f = params["bn1_scale"].reshape(fc1, 1) * params["w2"]          # (fc1, fc2)
    b2f = params["bn1_shift"] @ params["w2"]                          # (1, fc2)
    w3f = params["bn2_scale"] * params["w3_row"]                      # (1, fc2)
    b3f = params["b3"] + params["bn2_shift"] @ params["w3_row"].T     # (1, 1)

    # Batch tile: large multiple of 8 (pipelined when B > tile), shrunk to the
    # 8-rounded batch for small B so no padding is needed in the common case.
    tb = min(tile_b, _round_up(B, 8))
    b_pad = _round_up(B, tb)
    if b_pad != B:
        x0 = jnp.pad(x0, ((0, b_pad - B), (0, 0)))
        x1 = jnp.pad(x1, ((0, b_pad - B), (0, 0)))

    const2 = lambda i: (0, 0)   # weights: DMA once, stay VMEM-resident

    out = pl.pallas_call(
        base_head_kernel,
        out_shape=jax.ShapeDtypeStruct((1, b_pad), jnp.float32),
        grid=(b_pad // tb,),
        in_specs=[
            pl.BlockSpec((tb, backbone_feat), lambda i: (i, 0)),   # x0 stream
            pl.BlockSpec((tb, n_orders), lambda i: (i, 0)),        # x1 stream
            pl.BlockSpec((backbone_feat, fc1), const2),            # w1a
            pl.BlockSpec((n_orders, fc1), const2),                 # w1b
            pl.BlockSpec((fc1, fc2), const2),                      # w2 (BN1 folded)
            pl.BlockSpec((1, fc2), const2),                        # b2 (BN1 shift@w2)
            pl.BlockSpec((1, fc2), const2),                        # w3 row (BN2 folded)
            pl.BlockSpec((1, 1), const2),                          # b3 (+ t2@w3)
        ],
        out_specs=pl.BlockSpec((1, tb), lambda i: (0, i)),         # lane-dense
        compiler_params=pltpu.CompilerParams(
            dimension_semantics=("parallel",)),
    )(x0, x1, params["w1a"], params["w1b"], w2f, b2f, w3f, b3f)

    # Un-pad and restore the (B, 1) module output shape (tiny slice/reshape).
    return out[0, :B].reshape(B, 1)


def make_params(key, backbone_feat, n_orders, fc1, fc2):
    """Deterministic synthetic parameters matching BaseHead's __init__ shapes."""
    ks = jax.random.split(key, 8)
    eps = 1e-5
    in_feat = backbone_feat + n_orders

    # nn.Linear weights are (out, in) in torch; we store transposed (in, out)
    # so the kernel does x @ W.  w1 is split at the concat boundary.
    w1 = jax.random.normal(ks[0], (in_feat, fc1), jnp.float32) * 0.05
    w1a, w1b = w1[:backbone_feat], w1[backbone_feat:]
    w2 = jax.random.normal(ks[1], (fc1, fc2), jnp.float32) * 0.05
    w3 = jax.random.normal(ks[2], (fc2, 1), jnp.float32) * 0.05
    b3 = jax.random.normal(ks[3], (1, 1), jnp.float32) * 0.05

    # BatchNorm1d (eval mode) params + running stats, expressed as scale/shift.
    gamma1 = jax.random.uniform(ks[4], (fc1,), jnp.float32, 0.5, 1.5)
    beta1 = jax.random.normal(ks[5], (fc1,), jnp.float32) * 0.1
    mean1 = jnp.zeros((fc1,), jnp.float32)
    var1 = jnp.ones((fc1,), jnp.float32)
    s1 = gamma1 / jnp.sqrt(var1 + eps)
    t1 = beta1 - mean1 * s1

    gamma2 = jax.random.uniform(ks[6], (fc2,), jnp.float32, 0.5, 1.5)
    beta2 = jax.random.normal(ks[7], (fc2,), jnp.float32) * 0.1
    mean2 = jnp.zeros((fc2,), jnp.float32)
    var2 = jnp.ones((fc2,), jnp.float32)
    s2 = gamma2 / jnp.sqrt(var2 + eps)
    t2 = beta2 - mean2 * s2

    return {
        "w1a": w1a, "w1b": w1b,
        "bn1_scale": s1.reshape(1, fc1), "bn1_shift": t1.reshape(1, fc1),
        "w2": w2,
        "bn2_scale": s2.reshape(1, fc2), "bn2_shift": t2.reshape(1, fc2),
        "w3_row": w3.reshape(1, fc2),    # stored as a row for the lane reduce
        "b3": b3,
    }


def reference_forward(x0, x1, params):
    """Pure-JAX reference of the eval-mode forward pass (no BN folding)."""
    x = jnp.concatenate([x0, x1], axis=1).astype(jnp.float32)
    w1 = jnp.concatenate([params["w1a"], params["w1b"]], axis=0)
    h = x @ w1
    h = h * jax.nn.sigmoid(h)
    h = h * params["bn1_scale"] + params["bn1_shift"]
    h = h @ params["w2"]
    h = h * jax.nn.sigmoid(h)
    h = h * params["bn2_scale"] + params["bn2_shift"]
    return h @ params["w3_row"].T + params["b3"]


if __name__ == "__main__":
    # Small synthetic config consistent with the module:
    #   backbone in_feat = 120, len(orders) = 8 -> in_feat = 128
    #   fc_feat1 = in_feat // 4 = 32, fc_feat2 = in_feat // 16 = 8
    B = 8
    backbone_feat = 120
    n_orders = 8
    in_feat = backbone_feat + n_orders
    fc1 = in_feat // 4
    fc2 = in_feat // 16

    key = jax.random.PRNGKey(0)
    k_x0, k_x1, k_p = jax.random.split(key, 3)

    x0 = jax.random.normal(k_x0, (B, backbone_feat), jnp.float32)
    order_idx = jax.random.randint(k_x1, (B,), 0, n_orders)
    x1 = jax.nn.one_hot(order_idx, n_orders, dtype=jnp.float32)

    params = make_params(k_p, backbone_feat, n_orders, fc1, fc2)

    out = base_head_forward(x0, x1, params)
    out = jax.block_until_ready(out)

    ref = reference_forward(x0, x1, params)
    assert out.shape == (B, 1)
    assert jnp.allclose(out, ref, atol=1e-4, rtol=1e-4)

    # NOTE: Dropout layers are identity in eval/inference mode (no RNG needed);
    # BatchNorm uses running stats (no batch-stat update / training mode).
    print("KERNEL_OK")
</pallas_src>

<mosaic_0001>
module attributes {stable_mosaic.version = 11 : i64} {
  func.func @base_head_kernel(%arg0: i32, %arg1: memref<8x120xf32, #tpu.memory_space<vmem>>, %arg2: memref<8x8xf32, #tpu.memory_space<vmem>>, %arg3: memref<120x32xf32, #tpu.memory_space<vmem>>, %arg4: memref<8x32xf32, #tpu.memory_space<vmem>>, %arg5: memref<32x8xf32, #tpu.memory_space<vmem>>, %arg6: memref<1x8xf32, #tpu.memory_space<vmem>>, %arg7: memref<1x8xf32, #tpu.memory_space<vmem>>, %arg8: memref<1x1xf32, #tpu.memory_space<vmem>>, %arg9: memref<1x8xf32, #tpu.memory_space<vmem>>) attributes {dimension_semantics = [#tpu.dimension_semantics<parallel>], iteration_bounds = array<i64: 1>, scalar_prefetch = 0 : i64, scratch_operands = 0 : i64, tpu.core_type = #tpu.core_type<tc>, window_params = [{transform_indices = @transform_0, window_bounds = array<i64: 8, 120>}, {transform_indices = @transform_1, window_bounds = array<i64: 8, 8>}, {pipeline_mode = #tpu.pipeline_mode<synchronous>, transform_indices = @transform_2, window_bounds = array<i64: 120, 32>}, {pipeline_mode = #tpu.pipeline_mode<synchronous>, transform_indices = @transform_3, window_bounds = array<i64: 8, 32>}, {pipeline_mode = #tpu.pipeline_mode<synchronous>, transform_indices = @transform_4, window_bounds = array<i64: 32, 8>}, {pipeline_mode = #tpu.pipeline_mode<synchronous>, transform_indices = @transform_5, window_bounds = array<i64: 1, 8>}, {pipeline_mode = #tpu.pipeline_mode<synchronous>, transform_indices = @transform_6, window_bounds = array<i64: 1, 8>}, {pipeline_mode = #tpu.pipeline_mode<synchronous>, transform_indices = @transform_7, window_bounds = array<i64: 1, 1>}, {transform_indices = @transform_8, window_bounds = array<i64: 1, 8>}]} {
    %c0 = arith.constant 0 : index
    %c0_0 = arith.constant 0 : index
    %0 = vector.load %arg1[%c0, %c0_0] : memref<8x120xf32, #tpu.memory_space<vmem>>, vector<8x120xf32>
    %c0_1 = arith.constant 0 : index
    %c0_2 = arith.constant 0 : index
    %1 = vector.load %arg3[%c0_1, %c0_2] : memref<120x32xf32, #tpu.memory_space<vmem>>, vector<120x32xf32>
    %cst = arith.constant dense<0.000000e+00> : vector<8x32xf32>
    %2 = tpu.matmul %0, %1, %cst {dimension_numbers = #tpu.dot_dimension_numbers<[1], [0], [0], [1], [0, 0, 1, 1], [], []>} : vector<8x120xf32>, vector<120x32xf32>, vector<8x32xf32> -> vector<8x32xf32>
    %c0_3 = arith.constant 0 : index
    %c0_4 = arith.constant 0 : index
    %3 = vector.load %arg2[%c0_3, %c0_4] : memref<8x8xf32, #tpu.memory_space<vmem>>, vector<8x8xf32>
    %c0_5 = arith.constant 0 : index
    %c0_6 = arith.constant 0 : index
    %4 = vector.load %arg4[%c0_5, %c0_6] : memref<8x32xf32, #tpu.memory_space<vmem>>, vector<8x32xf32>
    %cst_7 = arith.constant dense<0.000000e+00> : vector<8x32xf32>
    %5 = tpu.matmul %3, %4, %cst_7 {dimension_numbers = #tpu.dot_dimension_numbers<[1], [0], [0], [1], [0, 0, 1, 1], [], []>} : vector<8x8xf32>, vector<8x32xf32>, vector<8x32xf32> -> vector<8x32xf32>
    %6 = arith.addf %2, %5 : vector<8x32xf32>
    %7 = arith.negf %6 : vector<8x32xf32>
    %8 = math.exp %7 : vector<8x32xf32>
    %cst_8 = arith.constant 1.000000e+00 : f32
    %9 = vector.broadcast %cst_8 : f32 to vector<8x32xf32>
    %10 = arith.addf %9, %8 : vector<8x32xf32>
    %11 = arith.divf %9, %10 : vector<8x32xf32>
    %12 = arith.mulf %6, %11 : vector<8x32xf32>
    %c0_9 = arith.constant 0 : index
    %c0_10 = arith.constant 0 : index
    %13 = vector.load %arg5[%c0_9, %c0_10] : memref<32x8xf32, #tpu.memory_space<vmem>>, vector<32x8xf32>
    %cst_11 = arith.constant dense<0.000000e+00> : vector<8x8xf32>
    %14 = tpu.matmul %12, %13, %cst_11 {dimension_numbers = #tpu.dot_dimension_numbers<[1], [0], [0], [1], [0, 0, 1, 1], [], []>} : vector<8x32xf32>, vector<32x8xf32>, vector<8x8xf32> -> vector<8x8xf32>
    %c0_12 = arith.constant 0 : index
    %c0_13 = arith.constant 0 : index
    %15 = vector.load %arg6[%c0_12, %c0_13] : memref<1x8xf32, #tpu.memory_space<vmem>>, vector<1x8xf32>
    %16 = vector.broadcast %15 : vector<1x8xf32> to vector<8x8xf32>
    %17 = arith.addf %14, %16 : vector<8x8xf32>
    %18 = arith.negf %17 : vector<8x8xf32>
    %19 = math.exp %18 : vector<8x8xf32>
    %cst_14 = arith.constant 1.000000e+00 : f32
    %20 = vector.broadcast %cst_14 : f32 to vector<8x8xf32>
    %21 = arith.addf %20, %19 : vector<8x8xf32>
    %22 = arith.divf %20, %21 : vector<8x8xf32>
    %23 = arith.mulf %17, %22 : vector<8x8xf32>
    %c0_15 = arith.constant 0 : index
    %c0_16 = arith.constant 0 : index
    %24 = vector.load %arg7[%c0_15, %c0_16] : memref<1x8xf32, #tpu.memory_space<vmem>>, vector<1x8xf32>
    %25 = vector.broadcast %24 : vector<1x8xf32> to vector<8x8xf32>
    %26 = arith.mulf %23, %25 : vector<8x8xf32>
    %cst_17 = arith.constant dense<0.000000e+00> : vector<8xf32>
    %27 = vector.multi_reduction <add>, %26, %cst_17 [1] : vector<8x8xf32> to vector<8xf32>
    %28 = vector.shape_cast %27 : vector<8xf32> to vector<1x8xf32>
    %c0_18 = arith.constant 0 : index
    %c0_19 = arith.constant 0 : index
    %29 = vector.load %arg8[%c0_18, %c0_19] : memref<1x1xf32, #tpu.memory_space<vmem>>, vector<1x1xf32>
    %30 = vector.broadcast %29 : vector<1x1xf32> to vector<1x8xf32>
    %31 = arith.addf %28, %30 : vector<1x8xf32>
    %c0_20 = arith.constant 0 : index
    %c0_21 = arith.constant 0 : index
    %32 = vector.load %arg9[%c0_20, %c0_21] : memref<1x8xf32, #tpu.memory_space<vmem>>, vector<1x8xf32>
    tpu.vector_store %arg9[%c0_20, %c0_21], %31 {strides = array<i32>} : memref<1x8xf32, #tpu.memory_space<vmem>>, vector<1x8xf32>,
    return
  }
  func.func @transform_0(%arg0: i32) -> (i32, i32) {
    %c0_i32 = arith.constant 0 : i32
    %c0_i32_0 = arith.constant 0 : i32
    return %arg0, %c0_i32 : i32, i32
  }
  func.func @transform_1(%arg0: i32) -> (i32, i32) {
    %c0_i32 = arith.constant 0 : i32
    %c0_i32_0 = arith.constant 0 : i32
    return %arg0, %c0_i32 : i32, i32
  }
  func.func @transform_2(%arg0: i32) -> (i32, i32) {
    %c0_i32 = arith.constant 0 : i32
    %c0_i32_0 = arith.constant 0 : i32
    %c0_i32_1 = arith.constant 0 : i32
    return %c0_i32, %c0_i32_0 : i32, i32
  }
  func.func @transform_3(%arg0: i32) -> (i32, i32) {
    %c0_i32 = arith.constant 0 : i32
    %c0_i32_0 = arith.constant 0 : i32
    %c0_i32_1 = arith.constant 0 : i32
    return %c0_i32, %c0_i32_0 : i32, i32
  }
  func.func @transform_4(%arg0: i32) -> (i32, i32) {
    %c0_i32 = arith.constant 0 : i32
    %c0_i32_0 = arith.constant 0 : i32
    %c0_i32_1 = arith.constant 0 : i32
    return %c0_i32, %c0_i32_0 : i32, i32
  }
  func.func @transform_5(%arg0: i32) -> (i32, i32) {
    %c0_i32 = arith.constant 0 : i32
    %c0_i32_0 = arith.constant 0 : i32
    %c0_i32_1 = arith.constant 0 : i32
    return %c0_i32, %c0_i32_0 : i32, i32
  }
  func.func @transform_6(%arg0: i32) -> (i32, i32) {
    %c0_i32 = arith.constant 0 : i32
    %c0_i32_0 = arith.constant 0 : i32
    %c0_i32_1 = arith.constant 0 : i32
    return %c0_i32, %c0_i32_0 : i32, i32
  }
  func.func @transform_7(%arg0: i32) -> (i32, i32) {
    %c0_i32 = arith.constant 0 : i32
    %c0_i32_0 = arith.constant 0 : i32
    %c0_i32_1 = arith.constant 0 : i32
    return %c0_i32, %c0_i32_0 : i32, i32
  }
  func.func @transform_8(%arg0: i32) -> (i32, i32) {
    %c0_i32 = arith.constant 0 : i32
    %c0_i32_0 = arith.constant 0 : i32
    return %c0_i32, %arg0 : i32, i32
  }
}

</mosaic_0001>

<llo_original>
// kernel: tpu_custom_call.1
$region0: #{tpu_custom_call.1}
  #allocation0 [shape = 'u32[]', space=smem, size = 0x4, offset = 0x4, fixed_abs, tag = 'smem constant byte address 0x4 - core index']
  #allocation1 [shape = 'u32[144,128]{1,0:T(1,128)}', space=vmem, size = 0x12000, scoped, tag = 'internal scratch']
  #allocation2 [shape = 'f32[1,1]{1,0:T(1,128)S(1)}', space=vmem, size = 0x200, scoped, tag = 'scoped memory for tpu_custom_call.1']
  %s0 = inlined_call_operand.vmem [shape: f32[8,120], index: 0, kind: input, shape index: {}]
  %s1 = inlined_call_operand.vmem [shape: f32[8,8], index: 1, kind: input, shape index: {}]
  %s2 = inlined_call_operand.vmem [shape: f32[120,32], index: 2, kind: input, shape index: {}]
  %s3 = inlined_call_operand.vmem [shape: f32[8,32], index: 3, kind: input, shape index: {}]
  %s4 = inlined_call_operand.vmem [shape: f32[32,8], index: 4, kind: input, shape index: {}]
  %s5 = inlined_call_operand.vmem [shape: f32[1,8], index: 5, kind: input, shape index: {}]
  %s6 = inlined_call_operand.vmem [shape: f32[1,8], index: 6, kind: input, shape index: {}]
  %s7 = inlined_call_operand.<no memory space> [shape: f32[1,1], index: 7, kind: input, shape index: {}]
  %s8 = inlined_call_operand.hbm [shape: f32[1,8], index: 8, kind: output, shape index: {}]
  %s9 = sld [smem:[#allocation0]]
  $region42: #{tpu_custom_call.1} parent=0
    _
  %s11 = ssub.s32 1, %s9
  %s12 = scalar_select 0, %s11, %s9
  %v13 = vstv %s7
  %14 = vst [vmem:[#allocation2] sm:$0x1] %v13
  $region1: #{tpu_custom_call.1} parent=0
    #allocation3 [shape = 'u8[512]{0}', space=vmem, size = 0x400, scoped, tag = 'output window, operand 0, single buffered']
    #allocation4 [shape = 's32[1]{0}', space=sflag, size = 0x4, scoped, tag = 'scoped memory for tpu_custom_call.1']
    %15 = vsyncpa [#allocation4], 0
    // Predicated region
    $region2: #{tpu_custom_call.1} parent=1 // pred_check
      _
    $region3: #{tpu_custom_call.1} parent=1 // pred_check_branch
      %17 = sbr.rel (0) target = $region5
    $region4: #{tpu_custom_call.1} parent=1 // pred_region
      _
    $region5: #{tpu_custom_call.1} parent=1 // pred_fallthru
      _
    // Predicated region
    $region6: #{tpu_custom_call.1} parent=1 // pred_check
      _
    $region7: #{tpu_custom_call.1} parent=1 // pred_check_branch
      %19 = sbr.rel (0) target = $region9
    $region8: #{tpu_custom_call.1} parent=1 // pred_region
      _
    $region9: #{tpu_custom_call.1} parent=1 // pred_fallthru
      _
    // Predicated region
    $region10: #{tpu_custom_call.1} parent=1 // pred_check
      _
    $region11: #{tpu_custom_call.1} parent=1 // pred_check_branch
      %21 = sbr.rel (0) target = $region13
    $region12: #{tpu_custom_call.1} parent=1 // pred_region
      _
    $region13: #{tpu_custom_call.1} parent=1 // pred_fallthru
      _
    // Predicated region
    $region14: #{tpu_custom_call.1} parent=1 // pred_check
      _
    $region15: #{tpu_custom_call.1} parent=1 // pred_check_branch
      %23 = sbr.rel (0) target = $region17
    $region16: #{tpu_custom_call.1} parent=1 // pred_region
      _
    $region17: #{tpu_custom_call.1} parent=1 // pred_fallthru
      _
    // Predicated region
    $region18: #{tpu_custom_call.1} parent=1 // pred_check
      _
    $region19: #{tpu_custom_call.1} parent=1 // pred_check_branch
      %25 = sbr.rel (0) target = $region21
    $region20: #{tpu_custom_call.1} parent=1 // pred_region
      _
    $region21: #{tpu_custom_call.1} parent=1 // pred_fallthru
      _
    // Predicated region
    $region22: #{tpu_custom_call.1} parent=1 // pred_check
      _
    $region23: #{tpu_custom_call.1} parent=1 // pred_check_branch
      %27 = sbr.rel (0) target = $region25
    $region24: #{tpu_custom_call.1} parent=1 // pred_region
      _
    $region25: #{tpu_custom_call.1} parent=1 // pred_fallthru
      _
    // Predicated region
    $region26: #{tpu_custom_call.1} parent=1 // pred_check
      _
    $region27: #{tpu_custom_call.1} parent=1 // pred_check_branch
      %29 = sbr.rel (0) target = $region29
    $region28: #{tpu_custom_call.1} parent=1 // pred_region
      _
    $region29: #{tpu_custom_call.1} parent=1 // pred_fallthru
      _
    // Predicated region
    $region30: #{tpu_custom_call.1} parent=1 // pred_check
      _
    $region31: #{tpu_custom_call.1} parent=1 // pred_check_branch
      %31 = sbr.rel (0) target = $region33
    $region32: #{tpu_custom_call.1} parent=1 // pred_region
      _
    $region33: #{tpu_custom_call.1} parent=1 // pred_fallthru
      _
    %v32 = vld [vmem:[%s0] sm:$0xff]
    %v33 = vld [vmem:[%s2] sm:$0xff]
    %v34 = vld [vmem:[%s2 + $0x8] sm:$0xff]
    %v35 = vld [vmem:[%s2 + $0x10] sm:$0xff]
    %v36 = vld [vmem:[%s2 + $0x18] sm:$0xff]
    %v37 = vld [vmem:[%s2 + $0x20] sm:$0xff]
    %v38 = vld [vmem:[%s2 + $0x28] sm:$0xff]
    %v39 = vld [vmem:[%s2 + $0x30] sm:$0xff]
    %v40 = vld [vmem:[%s2 + $0x38] sm:$0xff]
    %v41 = vld [vmem:[%s2 + $0x40] sm:$0xff]
    %v42 = vld [vmem:[%s2 + $0x48] sm:$0xff]
    %v43 = vld [vmem:[%s2 + $0x50] sm:$0xff]
    %v44 = vld [vmem:[%s2 + $0x58] sm:$0xff]
    %v45 = vld [vmem:[%s2 + $0x60] sm:$0xff]
    %v46 = vld [vmem:[%s2 + $0x68] sm:$0xff]
    %v47 = vld [vmem:[%s2 + $0x70] sm:$0xff]
    %v48 = vld [vmem:[%s1] sm:$0xff]
    %v49 = vld [vmem:[%s3] sm:$0xff]
    %vm50 = vcmask 64512
    %v52 = vsel %vm50, %v48, 0
    %54 = vmatprep.subr.mxu0 0.0
    %55 = vmatpush1.msra.mxu0 %v49
    %56 = vmatprep.subr.mxu0 0.0
    %57 = vmatpush1.msra.mxu0 0.0
    %58 = vmatprep.subr.mxu0 0.0
    %59 = vmatpush1.msra.mxu0 0.0
    %60 = vmatprep.subr.mxu0 0.0
    %61 = vmatpush1.msra.mxu0 0.0
    %62 = vmatprep.subr.mxu0 0.0
    %63 = vmatpush1.msra.mxu0 0.0
    %64 = vmatprep.subr.mxu0 0.0
    %65 = vmatpush1.msra.mxu0 0.0
    %66 = vmatprep.subr.mxu0 0.0
    %67 = vmatpush1.msra.mxu0 0.0
    %68 = vmatprep.subr.mxu0 0.0
    %69 = vmatpush1.msra.mxu0 0.0
    %70 = vmatprep.subr.mxu0 0.0
    %71 = vmatpush1.msra.mxu0 0.0
    %72 = vmatprep.subr.mxu0 0.0
    %73 = vmatpush1.msra.mxu0 0.0
    %74 = vmatprep.subr.mxu0 0.0
    %75 = vmatpush1.msra.mxu0 0.0
    %76 = vmatprep.subr.mxu0 0.0
    %77 = vmatpush1.msra.mxu0 0.0
    %78 = vmatprep.subr.mxu0 0.0
    %79 = vmatpush1.msra.mxu0 0.0
    %80 = vmatprep.subr.mxu0 0.0
    %81 = vmatpush1.msra.mxu0 0.0
    %82 = vmatprep.subr.mxu0 0.0
    %83 = vmatpush1.msra.mxu0 0.0
    %84 = vmatprep.subr.mxu0 0.0
    %85 = vmatpush1.msra.mxu0 0.0
    %86 = vmatprep.subr.mxu0 0.0
    %87 = vmatpush1.msra.mxu0 0.0
    %88 = vmatprep.subr.mxu0 0.0
    %89 = vmatpush1.msra.mxu0 0.0
    %90 = vmatprep.subr.mxu0 0.0
    %91 = vmatpush1.msra.mxu0 0.0
    %92 = vmatprep.subr.mxu0 0.0
    %93 = vmatpush1.msra.mxu0 0.0
    %94 = vmatprep.subr.mxu0 0.0
    %95 = vmatpush1.msra.mxu0 0.0
    %96 = vmatprep.subr.mxu0 0.0
    %97 = vmatpush1.msra.mxu0 0.0
    %98 = vmatprep.subr.mxu0 0.0
    %99 = vmatpush1.msra.mxu0 0.0
    %100 = vmatprep.subr.mxu0 0.0
    %101 = vmatpush1.msra.mxu0 0.0
    %102 = vmatprep.subr.mxu0 0.0
    %103 = vmatpush1.msra.mxu0 0.0
    %104 = vmatprep.subr.mxu0 0.0
    %105 = vmatpush1.msra.mxu0 0.0
    %106 = vmatprep.subr.mxu0 0.0
    %107 = vmatpush1.msra.mxu0 0.0
    %108 = vmatprep.subr.mxu0 0.0
    %109 = vmatpush1.msra.mxu0 0.0
    %110 = vmatprep.subr.mxu0 0.0
    %111 = vmatpush1.msra.mxu0 0.0
    %112 = vmatprep.subr.mxu0 0.0
    %113 = vmatpush1.msra.mxu0 0.0
    %114 = vmatprep.subr.mxu0 0.0
    %115 = vmatpush1.msra.mxu0 0.0
    %116 = vmatprep.subr.mxu0 0.0
    %117 = vmatpush1.msra.mxu0 0.0
    %118 = vmatprep.mubr.f32.mxu0 0.0
    %119 = vmatmul.mubr.f32.gmra.mrb[0].mxu0 %v52
    %v120 = vpop.f32.mrb[0].mxu0
    %v121 = vadd.f32 0.0, %v120
    %v122 = vpop.f32.mrb[0].mxu0
    %123 = vdwg.mxu0
    %vm124 = vcmask 982016
    %v126 = vsel %vm124, %v32, 0
    %128 = vmatprep.subr.mxu0 0.0
    %129 = vmatpush1.msra.mxu0 %v33
    %130 = vmatprep.subr.mxu0 0.0
    %131 = vmatpush1.msra.mxu0 %v34
    %132 = vmatprep.subr.mxu0 0.0
    %133 = vmatpush1.msra.mxu0 %v35
    %134 = vmatprep.subr.mxu0 0.0
    %135 = vmatpush1.msra.mxu0 %v36
    %136 = vmatprep.subr.mxu0 0.0
    %137 = vmatpush1.msra.mxu0 %v37
    %138 = vmatprep.subr.mxu0 0.0
    %139 = vmatpush1.msra.mxu0 %v38
    %140 = vmatprep.subr.mxu0 0.0
    %141 = vmatpush1.msra.mxu0 %v39
    %142 = vmatprep.subr.mxu0 0.0
    %143 = vmatpush1.msra.mxu0 %v40
    %144 = vmatprep.subr.mxu0 0.0
    %145 = vmatpush1.msra.mxu0 %v41
    %146 = vmatprep.subr.mxu0 0.0
    %147 = vmatpush1.msra.mxu0 %v42
    %148 = vmatprep.subr.mxu0 0.0
    %149 = vmatpush1.msra.mxu0 %v43
    %150 = vmatprep.subr.mxu0 0.0
    %151 = vmatpush1.msra.mxu0 %v44
    %152 = vmatprep.subr.mxu0 0.0
    %153 = vmatpush1.msra.mxu0 %v45
    %154 = vmatprep.subr.mxu0 0.0
    %155 = vmatpush1.msra.mxu0 %v46
    %156 = vmatprep.subr.mxu0 0.0
    %157 = vmatpush1.msra.mxu0 %v47
    %158 = vmatprep.subr.mxu0 0.0
    %159 = vmatpush1.msra.mxu0 0.0
    %160 = vmatprep.subr.mxu0 0.0
    %161 = vmatpush1.msra.mxu0 0.0
    %162 = vmatprep.subr.mxu0 0.0
    %163 = vmatpush1.msra.mxu0 0.0
    %164 = vmatprep.subr.mxu0 0.0
    %165 = vmatpush1.msra.mxu0 0.0
    %166 = vmatprep.subr.mxu0 0.0
    %167 = vmatpush1.msra.mxu0 0.0
    %168 = vmatprep.subr.mxu0 0.0
    %169 = vmatpush1.msra.mxu0 0.0
    %170 = vmatprep.subr.mxu0 0.0
    %171 = vmatpush1.msra.mxu0 0.0
    %172 = vmatprep.subr.mxu0 0.0
    %173 = vmatpush1.msra.mxu0 0.0
    %174 = vmatprep.subr.mxu0 0.0
    %175 = vmatpush1.msra.mxu0 0.0
    %176 = vmatprep.subr.mxu0 0.0
    %177 = vmatpush1.msra.mxu0 0.0
    %178 = vmatprep.subr.mxu0 0.0
    %179 = vmatpush1.msra.mxu0 0.0
    %180 = vmatprep.subr.mxu0 0.0
    %181 = vmatpush1.msra.mxu0 0.0
    %182 = vmatprep.subr.mxu0 0.0
    %183 = vmatpush1.msra.mxu0 0.0
    %184 = vmatprep.subr.mxu0 0.0
    %185 = vmatpush1.msra.mxu0 0.0
    %186 = vmatprep.subr.mxu0 0.0
    %187 = vmatpush1.msra.mxu0 0.0
    %188 = vmatprep.subr.mxu0 0.0
    %189 = vmatpush1.msra.mxu0 0.0
    %190 = vmatprep.subr.mxu0 0.0
    %191 = vmatpush1.msra.mxu0 0.0
    %192 = vmatprep.mubr.f32.mxu0 0.0
    %193 = vmatmul.mubr.f32.gmra.mrb[0].mxu0 %v126
    %v194 = vpop.f32.mrb[0].mxu0
    %v195 = vadd.f32 %v121, %v194
    %v196 = vpop.f32.mrb[0].mxu0
    %197 = vdwg.mxu0
    %v198 = vxor.u32 %v195, 2147483648
    %v199 = vmul.f32 %v198, 1.442695
    %v200 = vpow.pop %v199
    %v201 = vadd.f32 %v200, 1.0
    %v202 = vrcp.pop %v201
    %v203 = vmul.f32 1.0, %v202
    %v204 = vmul.f32 %v195, %v203
    %v205 = vld [vmem:[%s4] sm:$0xff]
    %v206 = vld [vmem:[%s4 + $0x8] sm:$0xff]
    %v207 = vld [vmem:[%s4 + $0x10] sm:$0xff]
    %v208 = vld [vmem:[%s4 + $0x18] sm:$0xff]
    %v209 = vld [vmem:[%s5] sm:$0x1]
    %v211 = vlaneseq
    %v212 = vshrl.u32 %v211, 7
    %v213 = vsub.s32 0, %v212
    %v214 = vrot.slane %v209, %v213
    %vm216 = vcmask 261120
    %v218 = vsel %vm216, %v204, 0
    %220 = vmatprep.subr.mxu0 0.0
    %221 = vmatpush1.msra.mxu0 %v205
    %222 = vmatprep.subr.mxu0 0.0
    %223 = vmatpush1.msra.mxu0 %v206
    %224 = vmatprep.subr.mxu0 0.0
    %225 = vmatpush1.msra.mxu0 %v207
    %226 = vmatprep.subr.mxu0 0.0
    %227 = vmatpush1.msra.mxu0 %v208
    %228 = vmatprep.subr.mxu0 0.0
    %229 = vmatpush1.msra.mxu0 0.0
    %230 = vmatprep.subr.mxu0 0.0
    %231 = vmatpush1.msra.mxu0 0.0
    %232 = vmatprep.subr.mxu0 0.0
    %233 = vmatpush1.msra.mxu0 0.0
    %234 = vmatprep.subr.mxu0 0.0
    %235 = vmatpush1.msra.mxu0 0.0
    %236 = vmatprep.subr.mxu0 0.0
    %237 = vmatpush1.msra.mxu0 0.0
    %238 = vmatprep.subr.mxu0 0.0
    %239 = vmatpush1.msra.mxu0 0.0
    %240 = vmatprep.subr.mxu0 0.0
    %241 = vmatpush1.msra.mxu0 0.0
    %242 = vmatprep.subr.mxu0 0.0
    %243 = vmatpush1.msra.mxu0 0.0
    %244 = vmatprep.subr.mxu0 0.0
    %245 = vmatpush1.msra.mxu0 0.0
    %246 = vmatprep.subr.mxu0 0.0
    %247 = vmatpush1.msra.mxu0 0.0
    %248 = vmatprep.subr.mxu0 0.0
    %249 = vmatpush1.msra.mxu0 0.0
    %250 = vmatprep.subr.mxu0 0.0
    %251 = vmatpush1.msra.mxu0 0.0
    %252 = vmatprep.subr.mxu0 0.0
    %253 = vmatpush1.msra.mxu0 0.0
    %254 = vmatprep.subr.mxu0 0.0
    %255 = vmatpush1.msra.mxu0 0.0
    %256 = vmatprep.subr.mxu0 0.0
    %257 = vmatpush1.msra.mxu0 0.0
    %258 = vmatprep.subr.mxu0 0.0
    %259 = vmatpush1.msra.mxu0 0.0
    %260 = vmatprep.subr.mxu0 0.0
    %261 = vmatpush1.msra.mxu0 0.0
    %262 = vmatprep.subr.mxu0 0.0
    %263 = vmatpush1.msra.mxu0 0.0
    %264 = vmatprep.subr.mxu0 0.0
    %265 = vmatpush1.msra.mxu0 0.0
    %266 = vmatprep.subr.mxu0 0.0
    %267 = vmatpush1.msra.mxu0 0.0
    %268 = vmatprep.subr.mxu0 0.0
    %269 = vmatpush1.msra.mxu0 0.0
    %270 = vmatprep.subr.mxu0 0.0
    %271 = vmatpush1.msra.mxu0 0.0
    %272 = vmatprep.subr.mxu0 0.0
    %273 = vmatpush1.msra.mxu0 0.0
    %274 = vmatprep.subr.mxu0 0.0
    %275 = vmatpush1.msra.mxu0 0.0
    %276 = vmatprep.subr.mxu0 0.0
    %277 = vmatpush1.msra.mxu0 0.0
    %278 = vmatprep.subr.mxu0 0.0
    %279 = vmatpush1.msra.mxu0 0.0
    %280 = vmatprep.subr.mxu0 0.0
    %281 = vmatpush1.msra.mxu0 0.0
    %282 = vmatprep.subr.mxu0 0.0
    %283 = vmatpush1.msra.mxu0 0.0
    %284 = vmatprep.mubr.f32.mxu0 0.0
    %285 = vmatmul.mubr.f32.gmra.mrb[0].mxu0 %v218
    %v286 = vpop.f32.mrb[0].mxu0
    %v287 = vadd.f32 %v214, %v286
    %v288 = vpop.f32.mrb[0].mxu0
    %289 = vdwg.mxu0
    %v290 = vxor.u32 %v287, 2147483648
    %v291 = vmul.f32 %v290, 1.442695
    %v292 = vpow.pop %v291
    %v293 = vadd.f32 %v292, 1.0
    %v294 = vrcp.pop %v293
    %v295 = vmul.f32 1.0, %v294
    %v296 = vmul.f32 %v287, %v295
    %v297 = vld [vmem:[%s6] sm:$0x1]
    %v299 = vlaneseq
    %v300 = vshrl.u32 %v299, 7
    %v301 = vsub.s32 0, %v300
    %v302 = vrot.slane %v297, %v301
    %v304 = vmul.f32 %v296, %v302
    %v305 = vsel %vm50, %v304, 0.0
    %306 = vadd.xlane.f32.xlu0 %v305
    %v307 = vpop.xlane.xlu0 %306
    %v308 = vld [vmem:[#allocation2] sm:$0x1]
    %310 = vset.pattern.permute.xlu0 0
    %311 = vperm.xlu0 %310, %v308
    %v312 = vpop.permute.xlu0 %311
    %v314 = vlaneseq
    %v315 = vshrl.u32 %v314, 7
    %v316 = vsub.s32 0, %v315
    %v317 = vrot.slane %v312, %v316
    %v318 = vadd.f32 %v307, %v317
    %v320 = vlaneseq
    %v321 = vand.u32 %v320, 127
    %v322 = vlaneseq
    %v323 = vshrl.u32 %v322, 7
    %v324 = vsub.s32 %v321, %v323
    %v325 = vrot.slane %v318, %v324
    %vm327 = vcmask 57344
    %328 = vst.msk [vmem:[#allocation3] sm:$0x1] %vm327, %v325
    // Predicated region
    $region34: #{tpu_custom_call.1} parent=1 // pred_check
      _
    $region35: #{tpu_custom_call.1} parent=1 // pred_check_branch
      %330 = sbr.rel (0) target = $region37
    $region36: #{tpu_custom_call.1} parent=1 // pred_region
      %s332 = ssub.s32 16, 16
      %333 = vsyncadd [#allocation4], %s332
      %s335 = sshll.u32 [#allocation3], 4
      %s336 = int_to_ptr.vmem [resolvable:$true] %s335
      %338 = dma.vmem_to_hbm [thread:$0]  %s336, 16, %s8, [#allocation4]
    $region37: #{tpu_custom_call.1} parent=1 // pred_fallthru
      _
    // Predicated region
    $region38: #{tpu_custom_call.1} parent=1 // pred_check
      _
    $region39: #{tpu_custom_call.1} parent=1 // pred_check_branch
      %340 = sbr.rel (0) target = $region41
    $region40: #{tpu_custom_call.1} parent=1 // pred_region
      %341 = dma.done [#allocation4], 16
    $region41: #{tpu_custom_call.1} parent=1 // pred_fallthru
      _
    %342 = vsyncpa [#allocation4], 1

</llo_original>
